<compile_context>
chip_gen: v6e
topology: v6e:2x2x1
jax: 0.10.0
libtpu: 0.0.40
codegen_flags: <defaults>
</compile_context>

<pallas_src>
import functools

import jax
import jax.numpy as jnp
from jax import lax
from jax.experimental import pallas as pl
from jax.experimental.pallas import tpu as pltpu


# ----------------------------------------------------------------------------
# per-generation sizing helpers
# ----------------------------------------------------------------------------

@functools.lru_cache(maxsize=None)
def _vmem_limit_bytes():
    """Scoped-VMEM budget = physical capacity minus headroom (v5e/v6e ~112MiB, v7x ~48MiB)."""
    cap = 64 * 1024 * 1024
    try:
        cap = int(pltpu.get_tpu_info().vmem_capacity_bytes)
    except Exception:
        pass
    return max(cap - 16 * 1024 * 1024, 32 * 1024 * 1024)


def _default_tile():
    # bigger KV/row tiles on v5e/v6e (128 MiB VMEM), smaller on v7x (64 MiB)
    return 1024 if _vmem_limit_bytes() > (64 << 20) else 512


@functools.lru_cache(maxsize=None)
def _buffered_one_supported():
    """Probe once whether pipeline_mode=pl.Buffered(1) lowers on this runtime."""
    try:
        def _probe(x_ref, o_ref):
            o_ref[...] = x_ref[...]
        spec = pl.BlockSpec((8, 128), lambda i: (0, 0), pipeline_mode=pl.Buffered(1))
        out = pl.pallas_call(
            _probe,
            out_shape=jax.ShapeDtypeStruct((8, 128), jnp.float32),
            grid=(1,),
            in_specs=[spec],
            out_specs=pl.BlockSpec((8, 128), lambda i: (0, 0)),
        )(jnp.zeros((8, 128), jnp.float32))
        jax.block_until_ready(out)
        return True
    except Exception:
        return False


def _resident_spec(block_shape, index_map=None):
    """Spec for grid-resident operands (weights / LN params): single-buffered if supported."""
    if index_map is None:
        index_map = lambda *_: (0,) * len(block_shape)
    if _buffered_one_supported():
        return pl.BlockSpec(block_shape, index_map, pipeline_mode=pl.Buffered(1))
    return pl.BlockSpec(block_shape, index_map)


# ----------------------------------------------------------------------------
# shared math helpers (used by kernels and by the pure-JAX references)
# ----------------------------------------------------------------------------

def _layernorm(x, w, b, eps=1e-5):
    """PyTorch nn.LayerNorm semantics: biased variance, eps inside rsqrt, affine."""
    x = x.astype(jnp.float32)
    mu = jnp.mean(x, axis=-1, keepdims=True)
    var = jnp.mean((x - mu) ** 2, axis=-1, keepdims=True)
    return (x - mu) * lax.rsqrt(var + eps) * w + b


def _gelu(x):
    # TODO(synk): PyTorch nn.GELU() defaults to exact erf; tanh approximation used here
    # (and in the reference) for cheap EUP lowering.
    c = 0.7978845608028654  # sqrt(2/pi)
    return 0.5 * x * (1.0 + jnp.tanh(c * (x + 0.044715 * x * x * x)))


# ----------------------------------------------------------------------------
# PerceiverAttention: flash-style fused kernel (head-group x batch x kv-tile grid)
# ----------------------------------------------------------------------------

def _attn_kernel(x_ref, lat_ref,
                 lnm_w_ref, lnm_b_ref, lnl_w_ref, lnl_b_ref,
                 wq_ref, wk_ref, wv_ref, wout_ref,
                 o_ref,
                 q_sc, m_sc, l_sc, acc_sc,
                 *, hg, dim_head):
    j = pl.program_id(2)
    n_kv_steps = pl.num_programs(2)

    def online_update(k_all, v_all):
        # k_all, v_all: (rows, hg*dim_head) bf16, heads packed head-major along lanes.
        # hg is small -> static unroll is fine (review: "unroll only if heads is small").
        for h in range(hg):
            k_h = k_all[:, h * dim_head:(h + 1) * dim_head]
            v_h = v_all[:, h * dim_head:(h + 1) * dim_head]
            q_h = q_sc[h]                                                  # (n_l, d) bf16
            s = lax.dot_general(q_h, k_h,
                                dimension_numbers=(((1,), (1,)), ((), ())),
                                preferred_element_type=jnp.float32)        # (n_l, rows)
            m_prev = m_sc[h]
            m_new = jnp.maximum(m_prev, jnp.max(s, axis=-1, keepdims=True))
            alpha = jnp.exp(m_prev - m_new)
            p = jnp.exp(s - m_new)                                         # f32 (v5e-safe)
            l_sc[h] = alpha * l_sc[h] + jnp.sum(p, axis=-1, keepdims=True)
            acc_sc[h] = alpha * acc_sc[h] + jnp.dot(
                p.astype(jnp.bfloat16), v_h, preferred_element_type=jnp.float32)
            m_sc[h] = m_new

    # -- first KV step: init carries, project latents (q + the latents' own K/V block)
    @pl.when(j == 0)
    def _init():
        m_sc[...] = jnp.full_like(m_sc, -jnp.inf)
        l_sc[...] = jnp.zeros_like(l_sc)
        acc_sc[...] = jnp.zeros_like(acc_sc)
        latn = _layernorm(lat_ref[0], lnl_w_ref[...], lnl_b_ref[...]).astype(jnp.bfloat16)
        # fused Q projection for all heads in this group (1/sqrt(dim_head) folded into wq)
        q_all = jnp.dot(latn, wq_ref[0],
                        preferred_element_type=jnp.float32).astype(jnp.bfloat16)
        for h in range(hg):
            q_sc[h] = q_all[:, h * dim_head:(h + 1) * dim_head]
        k_lat = jnp.dot(latn, wk_ref[0],
                        preferred_element_type=jnp.float32).astype(jnp.bfloat16)
        v_lat = jnp.dot(latn, wv_ref[0],
                        preferred_element_type=jnp.float32).astype(jnp.bfloat16)
        online_update(k_lat, v_lat)

    # -- every KV step: one tile of media tokens (replaces the kv_input concat),
    #    K/V projections fused across the group's heads (wide MXU output).
    xn = _layernorm(x_ref[0], lnm_w_ref[...], lnm_b_ref[...]).astype(jnp.bfloat16)
    k_all = jnp.dot(xn, wk_ref[0], preferred_element_type=jnp.float32).astype(jnp.bfloat16)
    v_all = jnp.dot(xn, wv_ref[0], preferred_element_type=jnp.float32).astype(jnp.bfloat16)
    online_update(k_all, v_all)

    # -- last KV step: normalize and out-project with a single fused matmul per group
    @pl.when(j == n_kv_steps - 1)
    def _finalize():
        parts = []
        for h in range(hg):
            inv_l = pl.reciprocal(l_sc[h], approx=True)                # EUP, not VPU divide
            parts.append((acc_sc[h] * inv_l).astype(jnp.bfloat16))
        o_cat = jnp.concatenate(parts, axis=-1)                        # (n_l, hg*dim_head)
        o_ref[0, 0] = jnp.dot(o_cat, wout_ref[0],
                              preferred_element_type=jnp.float32).astype(o_ref.dtype)


def perceiver_attention(x, latents, params, *, heads, dim_head,
                        kv_tile=None, head_groups=1):
    """x: (b, n_x, dim) media tokens, latents: (b, n_l, dim) latent queries. Returns bf16."""
    lnm_w, lnm_b, lnl_w, lnl_b, wq, wk, wv, wout = params
    b, n_x, dim = x.shape
    _, n_l, _ = latents.shape

    assert heads % head_groups == 0, "head_groups must divide heads"
    G = head_groups
    hg = heads // G

    if kv_tile is None:
        kv_tile = min(n_x, _default_tile())
    # TODO(synk): real visual-token counts that don't divide kv_tile need a masked tail tile.
    assert n_x % kv_tile == 0, "media sequence length must be a multiple of kv_tile"
    n_kv_steps = n_x // kv_tile

    # group-major fused weight slabs
    def to_group_in(w):   # (heads, dim, dh) -> (G, dim, hg*dh), heads head-major along cols
        return (w.reshape(G, hg, dim, dim_head)
                 .transpose(0, 2, 1, 3)
                 .reshape(G, dim, hg * dim_head))

    wq_g = to_group_in(wq)
    wk_g = to_group_in(wk)
    wv_g = to_group_in(wv)
    wout_g = wout.reshape(G, hg * dim_head, dim)

    kernel = functools.partial(_attn_kernel, hg=hg, dim_head=dim_head)

    parts = pl.pallas_call(
        kernel,
        out_shape=jax.ShapeDtypeStruct((G, b, n_l, dim), jnp.float32),
        grid=(G, b, n_kv_steps),
        in_specs=[
            pl.BlockSpec((1, kv_tile, dim), lambda g, i, j: (i, j, 0)),      # x KV tile
            pl.BlockSpec((1, n_l, dim), lambda g, i, j: (i, 0, 0)),          # latents (resident)
            _resident_spec((1, dim)),                                        # norm_media.weight
            _resident_spec((1, dim)),                                        # norm_media.bias
            _resident_spec((1, dim)),                                        # norm_latents.weight
            _resident_spec((1, dim)),                                        # norm_latents.bias
            _resident_spec((1, dim, hg * dim_head), lambda g, i, j: (g, 0, 0)),  # to_q (scaled)
            _resident_spec((1, dim, hg * dim_head), lambda g, i, j: (g, 0, 0)),  # to_k
            _resident_spec((1, dim, hg * dim_head), lambda g, i, j: (g, 0, 0)),  # to_v
            _resident_spec((1, hg * dim_head, dim), lambda g, i, j: (g, 0, 0)),  # to_out
        ],
        out_specs=pl.BlockSpec((1, 1, n_l, dim), lambda g, i, j: (g, i, 0, 0)),
        scratch_shapes=[
            pltpu.VMEM((hg, n_l, dim_head), jnp.bfloat16),   # q (computed once per (g,i))
            pltpu.VMEM((hg, n_l, 1), jnp.float32),           # running max
            pltpu.VMEM((hg, n_l, 1), jnp.float32),           # running denominator
            pltpu.VMEM((hg, n_l, dim_head), jnp.float32),    # running numerator
        ],
        compiler_params=pltpu.CompilerParams(
            dimension_semantics=("parallel", "parallel", "arbitrary"),
            vmem_limit_bytes=_vmem_limit_bytes()),
    )(x, latents, lnm_w, lnm_b, lnl_w, lnl_b, wq_g, wk_g, wv_g, wout_g)

    # combine per-head-group partial out-projections (f32), emit bf16 activation stream
    return jnp.sum(parts, axis=0).astype(jnp.bfloat16)


# ----------------------------------------------------------------------------
# down-projection Linear (bias-free), tiled over rows -> bf16 activation stream
# ----------------------------------------------------------------------------

def _linear_kernel(x_ref, w_ref, o_ref):
    o_ref[0] = jnp.dot(x_ref[0].astype(jnp.bfloat16), w_ref[...],
                       preferred_element_type=jnp.float32).astype(o_ref.dtype)


def linear_project(x, w_bf16, *, row_tile=None):
    b, n, d_in = x.shape
    d_out = w_bf16.shape[-1]
    if row_tile is None:
        row_tile = min(n, _default_tile())
    assert n % row_tile == 0
    return pl.pallas_call(
        _linear_kernel,
        out_shape=jax.ShapeDtypeStruct((b, n, d_out), jnp.bfloat16),
        grid=(b, n // row_tile),
        in_specs=[
            pl.BlockSpec((1, row_tile, d_in), lambda i, r: (i, r, 0)),
            _resident_spec((d_in, d_out)),
        ],
        out_specs=pl.BlockSpec((1, row_tile, d_out), lambda i, r: (i, r, 0)),
        compiler_params=pltpu.CompilerParams(
            dimension_semantics=("parallel", "parallel"),
            vmem_limit_bytes=_vmem_limit_bytes()),
    )(x, w_bf16)


# ----------------------------------------------------------------------------
# FeedForward (LN -> fc1 -> GELU -> fc2*scale) + residual, fused
# ----------------------------------------------------------------------------

def _ff_kernel(x_ref, res_ref, ln_w_ref, ln_b_ref, w1_ref, w2_ref, o_ref):
    xn = _layernorm(x_ref[0], ln_w_ref[...], ln_b_ref[...]).astype(jnp.bfloat16)
    h = jnp.dot(xn, w1_ref[...], preferred_element_type=jnp.float32)
    h = _gelu(h).astype(jnp.bfloat16)
    y = jnp.dot(h, w2_ref[...], preferred_element_type=jnp.float32)
    # FeedForward.scale is folded into w2 in the wrapper; residual stream kept f32
    o_ref[0] = y + res_ref[0].astype(jnp.float32)


def feedforward_residual(x, residual, params, *, row_tile=None):
    ln_w, ln_b, w1, w2s = params
    b, n, d_in = x.shape
    hidden = w1.shape[-1]
    d_out = w2s.shape[-1]
    assert residual.shape == (b, n, d_out)
    if row_tile is None:
        row_tile = min(n, _default_tile())
    assert n % row_tile == 0
    return pl.pallas_call(
        _ff_kernel,
        out_shape=jax.ShapeDtypeStruct((b, n, d_out), jnp.float32),
        grid=(b, n // row_tile),
        in_specs=[
            pl.BlockSpec((1, row_tile, d_in), lambda i, r: (i, r, 0)),
            pl.BlockSpec((1, row_tile, d_out), lambda i, r: (i, r, 0)),
            _resident_spec((1, d_in)),
            _resident_spec((1, d_in)),
            _resident_spec((d_in, hidden)),
            _resident_spec((hidden, d_out)),
        ],
        out_specs=pl.BlockSpec((1, row_tile, d_out), lambda i, r: (i, r, 0)),
        compiler_params=pltpu.CompilerParams(
            dimension_semantics=("parallel", "parallel"),
            vmem_limit_bytes=_vmem_limit_bytes()),
    )(x, residual, ln_w, ln_b, w1, w2s)


# ----------------------------------------------------------------------------
# PerceiverResampler forward (r = 0)
# ----------------------------------------------------------------------------

def perceiver_resampler_forward(x, params, *, heads, dim_head, kv_tile=None, head_groups=1):
    # TODO(synk): self_soft_matching (ToMe-style token merging) is not defined in the spec;
    # with r=0 it is the identity merge, i.e. latents = x.
    latents = x
    down_x = linear_project(x, params["w_down"])
    down_latent = down_x      # latents == x, so the down-projection is identical: reuse it
    for attn_p, ff_p in params["layers"]:
        down_latent = perceiver_attention(down_x, down_latent, attn_p,
                                          heads=heads, dim_head=dim_head,
                                          kv_tile=kv_tile, head_groups=head_groups)
        latents = feedforward_residual(down_latent, latents, ff_p)
    return latents


# ----------------------------------------------------------------------------
# pure-JAX references (same precision policy: bf16 matmul operands, f32 accum)
# ----------------------------------------------------------------------------

def reference_attention(x, latents, params, *, heads, dim_head):
    lnm_w, lnm_b, lnl_w, lnl_b, wq, wk, wv, wout = params
    xn = _layernorm(x, lnm_w, lnm_b).astype(jnp.bfloat16)
    latn = _layernorm(latents, lnl_w, lnl_b).astype(jnp.bfloat16)
    q = jnp.einsum("bnd,hde->bhne", latn, wq,
                   preferred_element_type=jnp.float32).astype(jnp.bfloat16)
    kv_in = jnp.concatenate([xn, latn], axis=1)
    k = jnp.einsum("bnd,hde->bhne", kv_in, wk,
                   preferred_element_type=jnp.float32).astype(jnp.bfloat16)
    v = jnp.einsum("bnd,hde->bhne", kv_in, wv,
                   preferred_element_type=jnp.float32).astype(jnp.bfloat16)
    sim = jnp.einsum("bhie,bhje->bhij", q, k, preferred_element_type=jnp.float32)
    sim = sim - sim.max(axis=-1, keepdims=True)
    attn = jax.nn.softmax(sim, axis=-1)
    out = jnp.einsum("bhij,bhje->bhie", attn.astype(jnp.bfloat16), v,
                     preferred_element_type=jnp.float32)
    out = jnp.einsum("bhie,hed->bid", out.astype(jnp.bfloat16), wout,
                     preferred_element_type=jnp.float32)
    return out.astype(jnp.bfloat16)


def reference_linear(x, w):
    return jnp.einsum("bnd,de->bne", x.astype(jnp.bfloat16), w,
                      preferred_element_type=jnp.float32).astype(jnp.bfloat16)


def reference_ff(x, residual, params):
    ln_w, ln_b, w1, w2s = params
    xn = _layernorm(x, ln_w, ln_b).astype(jnp.bfloat16)
    h = jnp.einsum("bnd,dh->bnh", xn, w1, preferred_element_type=jnp.float32)
    h = _gelu(h).astype(jnp.bfloat16)
    y = jnp.einsum("bnh,he->bne", h, w2s, preferred_element_type=jnp.float32)
    return y + residual.astype(jnp.float32)


def reference_resampler(x, params, *, heads, dim_head):
    latents = x
    down_x = reference_linear(x, params["w_down"])
    down_latent = down_x
    for attn_p, ff_p in params["layers"]:
        down_latent = reference_attention(down_x, down_latent, attn_p,
                                          heads=heads, dim_head=dim_head)
        latents = reference_ff(down_latent, latents, ff_p)
    return latents


# ----------------------------------------------------------------------------
# test
# ----------------------------------------------------------------------------

if __name__ == "__main__":
    # Small, lane-dense shapes (dim = inner = 128).  The PerceiverResampler forward is only
    # shape-consistent when out_dim == in_dim (residual + LayerNorm(dim)).
    batch, seq_len = 2, 32
    in_dim = out_dim = 128
    heads, dim_head = 4, 32
    inner = heads * dim_head
    hidden = in_dim
    depth = 2
    head_groups = 2            # exercises the per-group partial-output path (v7x 2-TC item)
    scale = dim_head ** (-0.5)

    key = jax.random.PRNGKey(0)
    ks = iter(jax.random.split(key, 16))

    x = jax.random.normal(next(ks), (batch, seq_len, in_dim), dtype=jnp.float32)

    # down projection weight, pre-transposed to (in, out), bf16
    w_down = (jax.random.normal(next(ks), (in_dim, out_dim), jnp.float32)
              * in_dim ** -0.5).astype(jnp.bfloat16)

    # PerceiverAttention params (LayerNorm params f32; projection weights head-major bf16;
    # the 1/sqrt(dim_head) scale is folded into to_q).
    lnm_w = 1.0 + 0.1 * jax.random.normal(next(ks), (1, out_dim), jnp.float32)
    lnm_b = 0.1 * jax.random.normal(next(ks), (1, out_dim), jnp.float32)
    lnl_w = 1.0 + 0.1 * jax.random.normal(next(ks), (1, out_dim), jnp.float32)
    lnl_b = 0.1 * jax.random.normal(next(ks), (1, out_dim), jnp.float32)
    wq = jax.random.normal(next(ks), (out_dim, inner), jnp.float32) * out_dim ** -0.5 * scale
    wk = jax.random.normal(next(ks), (out_dim, inner), jnp.float32) * out_dim ** -0.5
    wv = jax.random.normal(next(ks), (out_dim, inner), jnp.float32) * out_dim ** -0.5
    wout = jax.random.normal(next(ks), (inner, in_dim), jnp.float32) * inner ** -0.5

    def head_major_in(w):    # (dim, heads*dh) -> (heads, dim, dh)
        d = w.shape[0]
        return jnp.transpose(w.reshape(d, heads, dim_head), (1, 0, 2)).astype(jnp.bfloat16)

    def head_major_out(w):   # (heads*dh, dim) -> (heads, dh, dim)
        d = w.shape[1]
        return w.reshape(heads, dim_head, d).astype(jnp.bfloat16)

    attn_params = (lnm_w, lnm_b, lnl_w, lnl_b,
                   head_major_in(wq), head_major_in(wk), head_major_in(wv),
                   head_major_out(wout))

    # FeedForward params (fc2 randomly initialized instead of zeros so the test is
    # non-trivial; the learnable `scale` parameter is folded into fc2).
    ffln_w = 1.0 + 0.1 * jax.random.normal(next(ks), (1, in_dim), jnp.float32)
    ffln_b = 0.1 * jax.random.normal(next(ks), (1, in_dim), jnp.float32)
    w1 = (jax.random.normal(next(ks), (in_dim, hidden), jnp.float32)
          * in_dim ** -0.5).astype(jnp.bfloat16)
    ff_scale = 0.7
    w2s = (ff_scale * jax.random.normal(next(ks), (hidden, out_dim), jnp.float32)
           * hidden ** -0.5).astype(jnp.bfloat16)
    ff_params = (ffln_w, ffln_b, w1, w2s)

    params = {"w_down": w_down, "layers": [(attn_params, ff_params)] * depth}

    # --- attention kernel alone (multi-step online softmax: kv_tile < seq_len, 2 head groups)
    down_x = linear_project(x, w_down)
    attn_out = jax.block_until_ready(
        perceiver_attention(down_x, down_x, attn_params,
                            heads=heads, dim_head=dim_head,
                            kv_tile=16, head_groups=head_groups))
    attn_ref = reference_attention(down_x, down_x, attn_params,
                                   heads=heads, dim_head=dim_head)
    assert attn_out.shape == (batch, seq_len, in_dim)
    assert jnp.allclose(attn_out.astype(jnp.float32), attn_ref.astype(jnp.float32),
                        atol=3e-2, rtol=3e-2), "attention mismatch"

    # --- full resampler forward
    out = jax.block_until_ready(
        perceiver_resampler_forward(x, params, heads=heads, dim_head=dim_head,
                                    kv_tile=16, head_groups=head_groups))
    ref = reference_resampler(x, params, heads=heads, dim_head=dim_head)
    assert out.shape == (batch, seq_len, out_dim)
    assert jnp.allclose(out, ref, atol=7e-2, rtol=7e-2), "resampler mismatch"

    print("KERNEL_OK")
</pallas_src>

<mosaic_0001>
module attributes {stable_mosaic.version = 11 : i64} {
  func.func @_probe(%arg0: i32, %arg1: memref<8x128xf32, #tpu.memory_space<vmem>>, %arg2: memref<8x128xf32, #tpu.memory_space<vmem>>) attributes {dimension_semantics = [#tpu.dimension_semantics<arbitrary>], iteration_bounds = array<i64: 1>, scalar_prefetch = 0 : i64, scratch_operands = 0 : i64, tpu.core_type = #tpu.core_type<tc>, window_params = [{pipeline_mode = #tpu.pipeline_mode<synchronous>, transform_indices = @transform_0, window_bounds = array<i64: 8, 128>}, {pipeline_mode = #tpu.pipeline_mode<synchronous>, transform_indices = @transform_1, window_bounds = array<i64: 8, 128>}]} {
    %c0 = arith.constant 0 : index
    %c0_0 = arith.constant 0 : index
    %0 = vector.load %arg1[%c0, %c0_0] : memref<8x128xf32, #tpu.memory_space<vmem>>, vector<8x128xf32>
    %c0_1 = arith.constant 0 : index
    %c0_2 = arith.constant 0 : index
    %1 = vector.load %arg2[%c0_1, %c0_2] : memref<8x128xf32, #tpu.memory_space<vmem>>, vector<8x128xf32>
    tpu.vector_store %arg2[%c0_1, %c0_2], %0 {strides = array<i32>} : memref<8x128xf32, #tpu.memory_space<vmem>>, vector<8x128xf32>,
    return
  }
  func.func @transform_0(%arg0: i32) -> (i32, i32) {
    %c0_i32 = arith.constant 0 : i32
    %c0_i32_0 = arith.constant 0 : i32
    %c0_i32_1 = arith.constant 0 : i32
    return %c0_i32, %c0_i32_0 : i32, i32
  }
  func.func @transform_1(%arg0: i32) -> (i32, i32) {
    %c0_i32 = arith.constant 0 : i32
    %c0_i32_0 = arith.constant 0 : i32
    %c0_i32_1 = arith.constant 0 : i32
    return %c0_i32, %c0_i32_0 : i32, i32
  }
}

module attributes {stable_mosaic.version = 11 : i64} {
  func.func @_linear_kernel(%arg0: i32, %arg1: i32, %arg2: memref<1x32x128xf32, #tpu.memory_space<vmem>>, %arg3: memref<128x128xbf16, #tpu.memory_space<vmem>>, %arg4: memref<1x32x128xbf16, #tpu.memory_space<vmem>>) attributes {dimension_semantics = [#tpu.dimension_semantics<parallel>, #tpu.dimension_semantics<parallel>], iteration_bounds = array<i64: 2, 1>, scalar_prefetch = 0 : i64, scratch_operands = 0 : i64, tpu.core_type = #tpu.core_type<tc>, window_params = [{transform_indices = @transform_0, window_bounds = array<i64: 1, 32, 128>}, {pipeline_mode = #tpu.pipeline_mode<synchronous>, transform_indices = @transform_1, window_bounds = array<i64: 128, 128>}, {transform_indices = @transform_2, window_bounds = array<i64: 1, 32, 128>}]} {
    %c0 = arith.constant 0 : index
    %c0_0 = arith.constant 0 : index
    %c0_1 = arith.constant 0 : index
    %0 = vector.load %arg2[%c0, %c0_0, %c0_1] : memref<1x32x128xf32, #tpu.memory_space<vmem>>, vector<1x32x128xf32>
    %1 = vector.shape_cast %0 : vector<1x32x128xf32> to vector<32x128xf32>
    %2 = arith.truncf %1 : vector<32x128xf32> to vector<32x128xbf16>
    %c0_2 = arith.constant 0 : index
    %c0_3 = arith.constant 0 : index
    %3 = vector.load %arg3[%c0_2, %c0_3] : memref<128x128xbf16, #tpu.memory_space<vmem>>, vector<128x128xbf16>
    %cst = arith.constant dense<0.000000e+00> : vector<32x128xf32>
    %4 = tpu.matmul %2, %3, %cst {dimension_numbers = #tpu.dot_dimension_numbers<[1], [0], [0], [1], [0, 0, 1, 1], [], []>} : vector<32x128xbf16>, vector<128x128xbf16>, vector<32x128xf32> -> vector<32x128xf32>
    %5 = arith.truncf %4 : vector<32x128xf32> to vector<32x128xbf16>
    %c0_4 = arith.constant 0 : index
    %c0_5 = arith.constant 0 : index
    %c0_6 = arith.constant 0 : index
    %6 = vector.load %arg4[%c0_4, %c0_5, %c0_6] : memref<1x32x128xbf16, #tpu.memory_space<vmem>>, vector<1x32x128xbf16>
    %7 = vector.shape_cast %6 : vector<1x32x128xbf16> to vector<32x128xbf16>
    %8 = vector.shape_cast %5 : vector<32x128xbf16> to vector<1x32x128xbf16>
    tpu.vector_store %arg4[%c0_4, %c0_5, %c0_6], %8 {strides = array<i32>} : memref<1x32x128xbf16, #tpu.memory_space<vmem>>, vector<1x32x128xbf16>,
    return
  }
  func.func @transform_0(%arg0: i32, %arg1: i32) -> (i32, i32, i32) {
    %c0_i32 = arith.constant 0 : i32
    %c0_i32_0 = arith.constant 0 : i32
    return %arg0, %arg1, %c0_i32 : i32, i32, i32
  }
  func.func @transform_1(%arg0: i32, %arg1: i32) -> (i32, i32) {
    %c0_i32 = arith.constant 0 : i32
    %c0_i32_0 = arith.constant 0 : i32
    %c0_i32_1 = arith.constant 0 : i32
    return %c0_i32, %c0_i32_0 : i32, i32
  }
  func.func @transform_2(%arg0: i32, %arg1: i32) -> (i32, i32, i32) {
    %c0_i32 = arith.constant 0 : i32
    %c0_i32_0 = arith.constant 0 : i32
    return %arg0, %arg1, %c0_i32 : i32, i32, i32
  }
}

</mosaic_0001>

<llo_original>
// kernel: tpu_custom_call.1
$region0: #{tpu_custom_call.1}
  #allocation0 [shape = 'u32[]', space=smem, size = 0x4, offset = 0x4, fixed_abs, tag = 'smem constant byte address 0x4 - core index']
  #allocation1 [shape = 'u32[144,128]{1,0:T(1,128)}', space=vmem, size = 0x12000, scoped, tag = 'internal scratch']
  %s0 = inlined_call_operand.hbm [shape: f32[8,128], index: 0, kind: input, shape index: {}]
  %s1 = inlined_call_operand.hbm [shape: f32[8,128], index: 1, kind: output, shape index: {}]
  %s2 = sld [smem:[#allocation0]]
  $region18: #{tpu_custom_call.1} parent=0
    _
  %s4 = ssub.s32 1, %s2
  %s5 = scalar_select 0, %s4, %s2
  $region1: #{tpu_custom_call.1} parent=0
    #allocation2 [shape = 'u8[4096]{0}', space=vmem, size = 0x1000, scoped, tag = 'input window, operand 0, single buffered']
    #allocation3 [shape = 's32[1]{0}', space=sflag, size = 0x4, scoped, tag = 'scoped memory for tpu_custom_call.1']
    #allocation4 [shape = 's32[1]{0}', space=sflag, size = 0x4, scoped, tag = 'scoped memory for tpu_custom_call.1']
    #allocation5 [shape = 'u8[4096]{0}', space=vmem, size = 0x1000, scoped, tag = 'output window, operand 0, single buffered']
    %6 = vsyncpa [#allocation3], 0
    %7 = vsyncpa [#allocation4], 0
    // Predicated region
    $region2: #{tpu_custom_call.1} parent=1 // pred_check
      _
    $region3: #{tpu_custom_call.1} parent=1 // pred_check_branch
      %9 = sbr.rel (0) target = $region5
    $region4: #{tpu_custom_call.1} parent=1 // pred_region
      %s11 = ssub.s32 128, 128
      %12 = vsyncadd [#allocation3], %s11
      %s14 = sshll.u32 [#allocation2], 4
      %s15 = int_to_ptr.vmem [resolvable:$true] %s14
      %17 = dma.hbm_to_vmem [thread:$0]  %s0, 128, %s15, [#allocation3]
    $region5: #{tpu_custom_call.1} parent=1 // pred_fallthru
      _
    // Predicated region
    $region6: #{tpu_custom_call.1} parent=1 // pred_check
      _
    $region7: #{tpu_custom_call.1} parent=1 // pred_check_branch
      %19 = sbr.rel (0) target = $region9
    $region8: #{tpu_custom_call.1} parent=1 // pred_region
      %20 = dma.done [#allocation3], 128
    $region9: #{tpu_custom_call.1} parent=1 // pred_fallthru
      _
    %v21 = vld [vmem:[#allocation2] sm:$0xff]
    %22 = vst [vmem:[#allocation5] sm:$0xff] %v21
    // Predicated region
    $region10: #{tpu_custom_call.1} parent=1 // pred_check
      _
    $region11: #{tpu_custom_call.1} parent=1 // pred_check_branch
      %24 = sbr.rel (0) target = $region13
    $region12: #{tpu_custom_call.1} parent=1 // pred_region
      %s26 = ssub.s32 128, 128
      %27 = vsyncadd [#allocation4], %s26
      %s29 = sshll.u32 [#allocation5], 4
      %s30 = int_to_ptr.vmem [resolvable:$true] %s29
      %32 = dma.vmem_to_hbm [thread:$0]  %s30, 128, %s1, [#allocation4]
    $region13: #{tpu_custom_call.1} parent=1 // pred_fallthru
      _
    // Predicated region
    $region14: #{tpu_custom_call.1} parent=1 // pred_check
      _
    $region15: #{tpu_custom_call.1} parent=1 // pred_check_branch
      %34 = sbr.rel (0) target = $region17
    $region16: #{tpu_custom_call.1} parent=1 // pred_region
      %35 = dma.done [#allocation4], 128
    $region17: #{tpu_custom_call.1} parent=1 // pred_fallthru
      _
    %36 = vsyncpa [#allocation3], 1
    %37 = vsyncpa [#allocation4], 1

// kernel: tpu_custom_call.1
$region0: #{tpu_custom_call.1}
  #allocation0 [shape = 'u32[]', space=smem, size = 0x4, offset = 0x4, fixed_abs, tag = 'smem constant byte address 0x4 - core index']
  #allocation1 [shape = 'u32[144,128]{1,0:T(1,128)}', space=vmem, size = 0x12000, scoped, tag = 'internal scratch']
  %s0 = inlined_call_operand.hbm [shape: f32[2,32,128], index: 0, kind: input, shape index: {}]
  %s1 = inlined_call_operand.hbm [shape: bf16[128,128], index: 1, kind: input, shape index: {}]
  %s2 = inlined_call_operand.hbm [shape: bf16[2,32,128], index: 2, kind: output, shape index: {}]
  %s3 = sld [smem:[#allocation0]]
  $region49: #{tpu_custom_call.1} parent=0
    _
  %s5 = ssub.s32 1, %s3
  %s6 = scalar_select 0, %s5, %s3
  $region1: #{tpu_custom_call.1} parent=0
    #allocation2 [shape = 'u8[32768]{0}', space=vmem, size = 0x8000, scoped, tag = 'input window, operand 0']
    #allocation3 [shape = 's32[2]{0}', space=sflag, size = 0x8, scoped, tag = 'scoped memory for tpu_custom_call.1']
    #allocation4 [shape = 's32[2]{0}', space=sflag, size = 0x8, scoped, tag = 'scoped memory for tpu_custom_call.1']
    #allocation5 [shape = 'u8[32768]{0}', space=vmem, size = 0x8000, scoped, tag = 'input window, operand 1, single buffered']
    #allocation6 [shape = 's32[1]{0}', space=sflag, size = 0x4, scoped, tag = 'scoped memory for tpu_custom_call.1']
    #allocation7 [shape = 'u8[16384]{0}', space=vmem, size = 0x4000, scoped, tag = 'output window, operand 0']
    %7 = vsyncpa [#allocation3], 0
    %s8 = scalar_lea.sflag [#allocation3], 1
    %9 = vsyncpa %s8, 0
    %10 = vsyncpa [#allocation6], 0
    %11 = vsyncpa [#allocation4], 0
    %s12 = scalar_lea.sflag [#allocation4], 1
    %13 = vsyncpa %s12, 0
    loop: start=0, step=1, limit=4
    $region2: #{tpu_custom_call.1} parent=1 // loop_pre_header
      _
    $region3: #{tpu_custom_call.1} parent=1 // loop_header
      %s15 = sphi 0, %s19
      %p16 = scmp.ge.s32.totalorder %s15, 4
      %s22 = sphi 0, %s34
      %s23 = sphi 0, %s30
      %s24 = sphi 0, %s22
      %s25 = sphi 0, %s23
      %s26 = sphi 0, %s24
      %s27 = sphi 0, %s25
      %s39 = sphi 0, %s41
      %s42 = sphi 0, %s39
      %s43 = sphi 0, %s42
      %s59 = sphi 0, %s43
      %s63 = sphi 0, %s63
      %s65 = sphi 0, %s63
      %s66 = sphi 0, %s65
      %s80 = sphi 0, %s66
      %s88 = sphi 0, %s90
      %s91 = sphi 0, %s88
      %s92 = sphi 0, %s91
      %s108 = sphi 0, %s92
    $region4: #{tpu_custom_call.1} parent=1 // loop_header_branch
      %18 = sbr.rel (%p16) target = $region8
    $region5: #{tpu_custom_call.1} parent=1 // loop_body
      %s20 = ssub.s32 %s15, 1
      %s21 = ssub.s32 %s15, 2
      %s28 = sadd.s32 1, %s23
      %p29 = scmp.ge.s32.totalorder %s28, 1
      %s30 = scalar_select %p29, 0, %s28
      %s31 = sadd.s32 1, %s22
      %s32 = scalar_select %p29, %s31, %s22
      %p33 = scmp.ge.s32.totalorder %s32, 2
      %s34 = scalar_select %p33, 0, %s32
      %s35 = ssub.s32 %s22, %s34
      %s36 = ssub.s32 %s23, %s30
      %s37 = sor.u32 %s35, %s36
      %p38 = scmp.eq.s32.totalorder %s37, 0
      %s40 = sadd.s32 %s39, 1
      %s41 = scalar_select %p38, %s39, %s40
      %p44 = pneg %p38
      %p45 = scmp.eq.s32.totalorder %s15, 1
      %p46 = por %p44, %p45
      %p47 = scmp.ne.s32.totalorder %s39, %s42
      %p48 = scmp.eq.s32.totalorder %s15, 0
      %p49 = por %p47, %p48
      %p50 = scmp.ne.s32.totalorder %s39, %s42
      %p51 = scmp.eq.s32.totalorder %s20, 1
      %p52 = por %p50, %p51
      %p53 = scmp.ne.s32.totalorder %s42, %s43
      %p54 = scmp.eq.s32.totalorder %s20, 0
      %p55 = por %p53, %p54
      %p56 = scmp.ne.s32.totalorder %s42, %s43
      %p57 = scmp.eq.s32.totalorder %s21, 1
      %p58 = por %p56, %p57
      %p60 = scmp.ne.s32.totalorder %s43, %s59
      %p61 = scmp.eq.s32.totalorder %s21, 0
      %p62 = por %p60, %p61
      %s64 = sadd.s32 %s63, 1
      %p67 = scmp.eq.s32.totalorder %s15, 1
      %p68 = scmp.ne.s32.totalorder %s63, %s65
      %p69 = scmp.eq.s32.totalorder %s15, 0
      %p70 = por %p68, %p69
      %p71 = scmp.ne.s32.totalorder %s63, %s65
      %p72 = scmp.eq.s32.totalorder %s20, 1
      %p73 = por %p71, %p72
      %p74 = scmp.ne.s32.totalorder %s65, %s66
      %p75 = scmp.eq.s32.totalorder %s20, 0
      %p76 = por %p74, %p75
      %p77 = scmp.ne.s32.totalorder %s65, %s66
      %p78 = scmp.eq.s32.totalorder %s21, 1
      %p79 = por %p77, %p78
      %p81 = scmp.ne.s32.totalorder %s66, %s80
      %p82 = scmp.eq.s32.totalorder %s21, 0
      %p83 = por %p81, %p82
      %s84 = ssub.s32 %s22, %s34
      %s85 = ssub.s32 %s23, %s30
      %s86 = sor.u32 %s84, %s85
      %p87 = scmp.eq.s32.totalorder %s86, 0
      %s89 = sadd.s32 %s88, 1
      %s90 = scalar_select %p87, %s88, %s89
      %p93 = pneg %p87
      %p94 = scmp.eq.s32.totalorder %s15, 1
      %p95 = por %p93, %p94
      %p96 = scmp.ne.s32.totalorder %s88, %s91
      %p97 = scmp.eq.s32.totalorder %s15, 0
      %p98 = por %p96, %p97
      %p99 = scmp.ne.s32.totalorder %s88, %s91
      %p100 = scmp.eq.s32.totalorder %s20, 1
      %p101 = por %p99, %p100
      %p102 = scmp.ne.s32.totalorder %s91, %s92
      %p103 = scmp.eq.s32.totalorder %s20, 0
      %p104 = por %p102, %p103
      %p105 = scmp.ne.s32.totalorder %s91, %s92
      %p106 = scmp.eq.s32.totalorder %s21, 1
      %p107 = por %p105, %p106
      %p109 = scmp.ne.s32.totalorder %s92, %s108
      %p110 = scmp.eq.s32.totalorder %s21, 0
      %p111 = por %p109, %p110
      %p112 = scmp.le.s32.totalorder 1, %s15
      %p113 = scmp.lt.s32.totalorder %s15, 3
      %p114 = pnand %p112, %p113
      %p115 = pneg %p114
      // Predicated region
      $region9: #{tpu_custom_call.1} parent=5 // pred_check
        _
      $region10: #{tpu_custom_call.1} parent=5 // pred_check_branch
        %117 = sbr.rel (%p114) target = $region12
      $region11: #{tpu_custom_call.1} parent=5 // pred_region
        %s118 = ssub.s32 %s15, 1
        // Predicated region
        $region13: #{tpu_custom_call.1} parent=11 // pred_check
          %p119 = pneg %p76
        $region14: #{tpu_custom_call.1} parent=11 // pred_check_branch
          %121 = sbr.rel (%p119) target = $region16
        $region15: #{tpu_custom_call.1} parent=11 // pred_region
          %s123 = ssub.s32 1024, 1024
          %124 = vsyncadd [#allocation6], %s123
          %s125 = sshll.u32 [#allocation5], 4
          %s126 = int_to_ptr.vmem [resolvable:$true] %s125
          %131 = dma.hbm_to_vmem [thread:$0]  %s1, 1024, %s126, [#allocation6], 64, 64, 4
        $region16: #{tpu_custom_call.1} parent=11 // pred_fallthru
          _
      $region12: #{tpu_custom_call.1} parent=5 // pred_fallthru
        _
      %p132 = scmp.lt.s32.totalorder %s15, 2
      // Predicated region
      $region17: #{tpu_custom_call.1} parent=5 // pred_check
        %p133 = pneg %p132
      $region18: #{tpu_custom_call.1} parent=5 // pred_check_branch
        %135 = sbr.rel (%p133) target = $region20
      $region19: #{tpu_custom_call.1} parent=5 // pred_region
        // Predicated region
        $region21: #{tpu_custom_call.1} parent=19 // pred_check
          %p136 = pneg %p49
        $region22: #{tpu_custom_call.1} parent=19 // pred_check_branch
          %138 = sbr.rel (%p136) target = $region24
        $region23: #{tpu_custom_call.1} parent=19 // pred_region
          %s139 = sand.u32 %s39, 1
          %s140 = scalar_lea.sflag [#allocation3], %s139
          %s141 = sand.u32 %s39, 1
          %s142 = smul.addr %s141, 32
          %s143 = scalar_lea.vmem [#allocation2], %s142
          %s144 = smul.u32 4, %s23
          %s146 = ssub.s32 512, 512
          %147 = vsyncadd %s140, %s146
          %s148 = smul.addr %s22, 4
          %s149 = sadd.s32 %s144, %s148
          %s150 = smul.addr %s149, 128
          %s151 = scalar_lea.hbm %s0, %s150
          %s152 = sshll.u32 %s143, 4
          %s153 = int_to_ptr.vmem [resolvable:$true] %s152
          %158 = dma.hbm_to_vmem [thread:$0]  %s151, 512, %s153, %s140, 128, 128, 8
        $region24: #{tpu_custom_call.1} parent=19 // pred_fallthru
          _
      $region20: #{tpu_custom_call.1} parent=5 // pred_fallthru
        _
      %p159 = scmp.le.s32.totalorder 1, %s15
      %p160 = scmp.lt.s32.totalorder %s15, 3
      %p161 = pnand %p159, %p160
      %p162 = pneg %p161
      // Predicated region
      $region25: #{tpu_custom_call.1} parent=5 // pred_check
        _
      $region26: #{tpu_custom_call.1} parent=5 // pred_check_branch
        %164 = sbr.rel (%p161) target = $region28
      $region27: #{tpu_custom_call.1} parent=5 // pred_region
        %s165 = ssub.s32 %s15, 1
        %s166 = sand.u32 %s42, 1
        %s167 = scalar_lea.sflag [#allocation3], %s166
        %s168 = sand.u32 %s42, 1
        %s169 = smul.addr %s168, 32
        %s170 = scalar_lea.vmem [#allocation2], %s169
        // Predicated region
        $region29: #{tpu_custom_call.1} parent=27 // pred_check
          %p171 = pneg %p55
        $region30: #{tpu_custom_call.1} parent=27 // pred_check_branch
          %173 = sbr.rel (%p171) target = $region32
        $region31: #{tpu_custom_call.1} parent=27 // pred_region
          %174 = dma.done %s167, 512
        $region32: #{tpu_custom_call.1} parent=27 // pred_fallthru
          _
        // Predicated region
        $region33: #{tpu_custom_call.1} parent=27 // pred_check
          %p175 = pneg %p76
        $region34: #{tpu_custom_call.1} parent=27 // pred_check_branch
          %177 = sbr.rel (%p175) target = $region36
        $region35: #{tpu_custom_call.1} parent=27 // pred_region
          %178 = dma.done [#allocation6], 1024
        $region36: #{tpu_custom_call.1} parent=27 // pred_fallthru
          _
        %s179 = sand.u32 %s42, 1
        %s180 = scalar_lea.sflag [#allocation3], %s179
        %s181 = sand.u32 %s42, 1
        %s182 = smul.addr %s181, 32
        %s183 = scalar_lea.vmem [#allocation2], %s182
        %p184 = pneg %p55
        %p185 = pneg %p52
        %p186 = pneg %p76
        %p187 = pneg %p73
        %p188 = pneg %p104
        %p189 = pneg %p101
        %s190 = sand.u32 %s91, 1
        %s191 = scalar_lea.sflag [#allocation4], %s190
        %s192 = sand.u32 %s91, 1
        %s193 = smul.addr %s192, 16
        %s194 = scalar_lea.vmem [#allocation7], %s193
        %s195 = smul.u32 4, %s25
        %s196 = smul.u32 4, %s25
        %v198 = vld [vmem:[%s170] sm:$0xff]
        %v199 = vld [vmem:[%s170 + $0x8] sm:$0xff]
        %v200 = vld [vmem:[%s170 + $0x10] sm:$0xff]
        %v201 = vld [vmem:[%s170 + $0x18] sm:$0xff]
        %v202 = vpack.c.bf16 %v199, %v198
        %v203 = vpack.c.bf16 %v201, %v200
        %v204 = vld [vmem:[#allocation5] sm:$0xf]
        %v205 = vld [vmem:[#allocation5 + $0x4] sm:$0xf]
        %v206 = vld [vmem:[#allocation5 + $0x8] sm:$0xf]
        %v207 = vld [vmem:[#allocation5 + $0xc] sm:$0xf]
        %v208 = vld [vmem:[#allocation5 + $0x10] sm:$0xf]
        %v209 = vld [vmem:[#allocation5 + $0x14] sm:$0xf]
        %v210 = vld [vmem:[#allocation5 + $0x18] sm:$0xf]
        %v211 = vld [vmem:[#allocation5 + $0x1c] sm:$0xf]
        %v212 = vld [vmem:[#allocation5 + $0x20] sm:$0xf]
        %v213 = vld [vmem:[#allocation5 + $0x24] sm:$0xf]
        %v214 = vld [vmem:[#allocation5 + $0x28] sm:$0xf]
        %v215 = vld [vmem:[#allocation5 + $0x2c] sm:$0xf]
        %v216 = vld [vmem:[#allocation5 + $0x30] sm:$0xf]
        %v217 = vld [vmem:[#allocation5 + $0x34] sm:$0xf]
        %v218 = vld [vmem:[#allocation5 + $0x38] sm:$0xf]
        %v219 = vld [vmem:[#allocation5 + $0x3c] sm:$0xf]
        %v236 = vunpack.c.l.b16 %v204
        %v237 = vunpack.c.l.b16 %v205
        %v238 = vunpack.c.l.b16 %v206
        %v239 = vunpack.c.l.b16 %v207
        %v240 = vunpack.c.l.b16 %v208
        %v241 = vunpack.c.l.b16 %v209
        %v242 = vunpack.c.l.b16 %v210
        %v243 = vunpack.c.l.b16 %v211
        %v244 = vunpack.c.l.b16 %v212
        %v245 = vunpack.c.l.b16 %v213
        %v246 = vunpack.c.l.b16 %v214
        %v247 = vunpack.c.l.b16 %v215
        %v248 = vunpack.c.l.b16 %v216
        %v249 = vunpack.c.l.b16 %v217
        %v250 = vunpack.c.l.b16 %v218
        %v251 = vunpack.c.l.b16 %v219
        %v252 = vpack.c.b16 %v237, %v236
        %v253 = vpack.c.b16 %v239, %v238
        %v254 = vpack.c.b16 %v241, %v240
        %v255 = vpack.c.b16 %v243, %v242
        %v256 = vpack.c.b16 %v245, %v244
        %v257 = vpack.c.b16 %v247, %v246
        %v258 = vpack.c.b16 %v249, %v248
        %v259 = vpack.c.b16 %v251, %v250
        %268 = vmatprep.subr.bf16.mxu0 0
        %269 = vmatpush1.bf16.msra.mxu0 %v259
        %270 = vmatprep.subr.bf16.mxu0 0
        %271 = vmatpush1.bf16.msra.mxu0 %v258
        %272 = vmatprep.subr.bf16.mxu0 0
        %273 = vmatpush1.bf16.msra.mxu0 %v257
        %274 = vmatprep.subr.bf16.mxu0 0
        %275 = vmatpush1.bf16.msra.mxu0 %v256
        %276 = vmatprep.subr.bf16.mxu0 0
        %277 = vmatpush1.bf16.msra.mxu0 %v255
        %278 = vmatprep.subr.bf16.mxu0 0
        %279 = vmatpush1.bf16.msra.mxu0 %v254
        %280 = vmatprep.subr.bf16.mxu0 0
        %281 = vmatpush1.bf16.msra.mxu0 %v253
        %282 = vmatprep.subr.bf16.mxu0 0
        %283 = vmatpush1.bf16.msra.mxu0 %v252
        %284 = vmatprep.subr.bf16.mxu0 0
        %285 = vmatpush2.bf16.msra.mxu0 0
        %286 = vmatprep.subr.bf16.mxu0 0
        %287 = vmatpush2.bf16.msra.mxu0 0
        %288 = vmatprep.subr.bf16.mxu0 0
        %289 = vmatpush2.bf16.msra.mxu0 0
        %290 = vmatprep.subr.bf16.mxu0 0
        %291 = vmatpush2.bf16.msra.mxu0 0
        %292 = vmatprep.subr.bf16.mxu0 0
        %293 = vmatpush2.bf16.msra.mxu0 0
        %294 = vmatprep.subr.bf16.mxu0 0
        %295 = vmatpush2.bf16.msra.mxu0 0
        %296 = vmatprep.subr.bf16.mxu0 0
        %297 = vmatpush2.bf16.msra.mxu0 0
        %298 = vmatprep.subr.bf16.mxu0 0
        %299 = vmatpush2.bf16.msra.mxu0 0
        %300 = vmatprep.mubr.bf16.mxu0 0
        %301 = vmatmul.mubr.bf16.gmra.mxu0 %v202
        %v302 = vpop.f32.mrf.mxu0
        %v303 = vadd.f32 0.0, %v302
        %v304 = vpop.f32.mrf.mxu0
        %v305 = vpop.f32.mrf.mxu0
        %v306 = vadd.f32 0.0, %v305
        %v307 = vpop.f32.mrf.mxu0
        %308 = vmatprep.mubr.bf16.mxu0 0
        %309 = vmatmul.mubr.bf16.gmra.mxu0 %v203
        %v310 = vpop.f32.mrf.mxu0
        %v311 = vadd.f32 0.0, %v310
        %v312 = vpop.f32.mrf.mxu0
        %v313 = vpop.f32.mrf.mxu0
        %v314 = vadd.f32 0.0, %v313
        %v315 = vpop.f32.mrf.mxu0
        %316 = vdwg.mxu0
        %v317 = vpack.c.bf16 %v306, %v303
        %v318 = vpack.c.bf16 %v314, %v311
        %v321 = vunpack.c.l.b16 %v317
        %v322 = vunpack.c.h.b16 %v317
        %v323 = vunpack.c.l.b16 %v318
        %v324 = vunpack.c.h.b16 %v318
        %v325 = vpack.c.b16 %v321, %v321
        %v326 = vpack.c.b16 %v322, %v322
        %v327 = vpack.c.b16 %v323, %v323
        %v328 = vpack.c.b16 %v324, %v324
        %333 = vst [vmem:[%s194] sm:$0xf] %v325
        %334 = vst [vmem:[%s194 + $0x4] sm:$0xf] %v326
        %335 = vst [vmem:[%s194 + $0x8] sm:$0xf] %v327
        %336 = vst [vmem:[%s194 + $0xc] sm:$0xf] %v328
        %s337 = sand.u32 %s91, 1
        %s338 = scalar_lea.sflag [#allocation4], %s337
        %s339 = sand.u32 %s91, 1
        %s340 = smul.addr %s339, 16
        %s341 = scalar_lea.vmem [#allocation7], %s340
        // Predicated region
        $region37: #{tpu_custom_call.1} parent=27 // pred_check
          %p342 = pneg %p101
        $region38: #{tpu_custom_call.1} parent=27 // pred_check_branch
          %344 = sbr.rel (%p342) target = $region40
        $region39: #{tpu_custom_call.1} parent=27 // pred_region
          %s345 = smul.u32 4, %s25
          %s347 = ssub.s32 256, 256
          %348 = vsyncadd %s338, %s347
          %s349 = smul.addr %s24, 4
          %s350 = sadd.s32 %s345, %s349
          %s351 = smul.addr %s350, 64
          %s352 = scalar_lea.hbm %s2, %s351
          %s353 = sshll.u32 %s341, 4
          %s354 = int_to_ptr.vmem [resolvable:$true] %s353
          %359 = dma.vmem_to_hbm [thread:$0]  %s354, 256, %s352, %s338, 64, 64, 4
        $region40: #{tpu_custom_call.1} parent=27 // pred_fallthru
          _
      $region28: #{tpu_custom_call.1} parent=5 // pred_fallthru
        _
      %p360 = scmp.le.s32.totalorder 2, %s15
      // Predicated region
      $region41: #{tpu_custom_call.1} parent=5 // pred_check
        %p361 = pneg %p360
      $region42: #{tpu_custom_call.1} parent=5 // pred_check_branch
        %363 = sbr.rel (%p361) target = $region44
      $region43: #{tpu_custom_call.1} parent=5 // pred_region
        %s364 = ssub.s32 %s15, 2
        // Predicated region
        $region45: #{tpu_custom_call.1} parent=43 // pred_check
          %p365 = pneg %p107
        $region46: #{tpu_custom_call.1} parent=43 // pred_check_branch
          %367 = sbr.rel (%p365) target = $region48
        $region47: #{tpu_custom_call.1} parent=43 // pred_region
          %s368 = sand.u32 %s92, 1
          %s369 = scalar_lea.sflag [#allocation4], %s368
          %s370 = sand.u32 %s92, 1
          %s371 = smul.addr %s370, 16
          %s372 = scalar_lea.vmem [#allocation7], %s371
          %373 = dma.done %s369, 256
        $region48: #{tpu_custom_call.1} parent=43 // pred_fallthru
          _
      $region44: #{tpu_custom_call.1} parent=5 // pred_fallthru
        _
    $region6: #{tpu_custom_call.1} parent=1 // loop_footer
      %s19 = sadd.s32 1, %s15
    $region7: #{tpu_custom_call.1} parent=1 // loop_footer_branch
      %14 = sbr.rel target = $region3
    $region8: #{tpu_custom_call.1} parent=1 // loop_exit
      _
    %374 = vsyncpa [#allocation3], 1
    %s375 = scalar_lea.sflag [#allocation3], 1
    %376 = vsyncpa %s375, 1
    %377 = vsyncpa [#allocation6], 1
    %378 = vsyncpa [#allocation4], 1
    %s379 = scalar_lea.sflag [#allocation4], 1
    %380 = vsyncpa %s379, 1

</llo_original>
